<compile_context>
chip_gen: v5e
topology: v5e:2x2
jax: 0.10.0
libtpu: 0.0.40
codegen_flags: <defaults>
</compile_context>

<pallas_src>
import jax
import jax.numpy as jnp
from jax.experimental import pallas as pl
from jax.experimental.pallas import tpu as pltpu


def value_head_kernel(x_ref, cw_ref, shift_ref, w1_ref, b1_ref, w2_ref, b2_ref,
                      out_ref):
    # x_ref    : (TB, C*S) f32  VMEM   batch tile, flattened NCS layout
    # cw_ref   : (C,)      f32  SMEM   conv1x1 weight with BN scale pre-folded
    # shift_ref: (1,)      f32  SMEM   BN shift (beta - mean * scale)
    # w1_ref   : (S, Hd)   f32  VMEM   fc1 weight, pre-transposed (resident)
    # b1_ref   : (1, Hd)   f32  VMEM   fc1 bias (resident)
    # w2_ref   : (1, Hd)   f32  VMEM   fc2 weight row (resident)
    # b2_ref   : (1,)      f32  SMEM   fc2 bias
    # out_ref  : (TB, 1)   f32  VMEM
    S = w1_ref.shape[0]
    C = x_ref.shape[1] // S

    # Conv2d 1x1 (single output channel, BN scale folded in) as C lane-aligned
    # VPU FMAs over static slices of the (TB, C*S) tile.
    conv = cw_ref[0] * x_ref[:, 0:S]
    for c in range(1, C):
        conv = conv + cw_ref[c] * x_ref[:, c * S:(c + 1) * S]

    # BatchNorm shift + ReLU.
    y = jnp.maximum(conv + shift_ref[0], 0.0)                        # (TB, S)

    # fc1 + ReLU on the MXU, f32 accumulation.
    # (Optional on v6e/v7x: cast y and w1 to bf16 here for MXU throughput.)
    h = jnp.dot(y, w1_ref[...], preferred_element_type=jnp.float32) + b1_ref[...]
    h = jnp.maximum(h, 0.0)                                          # (TB, Hd)

    # fc2 (N=1): VPU multiply + lane reduce -- keep it off the MXU.
    v = jnp.sum(h * w2_ref[...], axis=-1, keepdims=True) + b2_ref[0]
    out_ref[...] = jnp.tanh(v)                                       # (TB, 1)


def value_head(x_nchw, conv_w, bn_scale, bn_shift, fc1_w, fc1_b, fc2_w, fc2_b,
               *, batch_tile=512):
    """x_nchw: (B, C, H, W) f32; weights in PyTorch conventions.

    conv_w   : (1, C, 1, 1)  Conv2d(C, 1, kernel=1, bias=False) weight
    bn_scale, bn_shift : eval-mode BatchNorm2d(1) scalars
                         (scale = gamma/sqrt(var+eps), shift = beta - mean*scale)
    fc1_w    : (Hd, S),  fc1_b : (Hd,)
    fc2_w    : (1, Hd),  fc2_b : (1,)
    """
    B, C, H, W = x_nchw.shape
    S = H * W
    Hd = fc1_w.shape[0]

    # Zero-copy flatten to (B, C*S): trailing contiguous dims of NCHW.
    x2d = x_nchw.reshape(B, C * S)

    # Batch tile: multiple of 8 sublanes, capped so the double-buffered
    # (TB, C*S) f32 x tiles stay small even on v7x's 64 MiB VMEM.
    TB = min(batch_tile, B)
    TB = ((TB + 7) // 8) * 8
    num_tiles = -(-B // TB)
    B_pad = num_tiles * TB
    if B_pad != B:
        x2d = jnp.pad(x2d, ((0, B_pad - B), (0, 0)))

    # Fold BN scale into the (tiny) conv weight; keep only the shift.
    cw = (conv_w.reshape(C) * bn_scale).astype(jnp.float32)          # (C,)
    shift = jnp.full((1,), bn_shift, dtype=jnp.float32)              # (1,)
    w1_t = fc1_w.T.astype(jnp.float32)                               # (S, Hd)
    b1 = fc1_b.reshape(1, Hd).astype(jnp.float32)                    # (1, Hd)
    w2_row = fc2_w.reshape(1, Hd).astype(jnp.float32)                # (1, Hd)
    b2 = fc2_b.reshape(1).astype(jnp.float32)                        # (1,)

    flops = 2 * B_pad * (C * S + S * Hd + Hd)
    bytes_accessed = 4 * (B_pad * C * S + S * Hd + 2 * Hd + B_pad)

    out = pl.pallas_call(
        value_head_kernel,
        out_shape=jax.ShapeDtypeStruct((B_pad, 1), jnp.float32),
        grid_spec=pltpu.PrefetchScalarGridSpec(
            num_scalar_prefetch=0,
            grid=(num_tiles,),
            in_specs=[
                pl.BlockSpec((TB, C * S), lambda i: (i, 0)),          # x tile
                pl.BlockSpec(memory_space=pltpu.MemorySpace.SMEM),    # cw
                pl.BlockSpec(memory_space=pltpu.MemorySpace.SMEM),    # bn shift
                pl.BlockSpec((S, Hd), lambda i: (0, 0)),              # w1 (resident)
                pl.BlockSpec((1, Hd), lambda i: (0, 0)),              # b1 (resident)
                pl.BlockSpec((1, Hd), lambda i: (0, 0)),              # w2 (resident)
                pl.BlockSpec(memory_space=pltpu.MemorySpace.SMEM),    # b2
            ],
            out_specs=pl.BlockSpec((TB, 1), lambda i: (i, 0)),
        ),
        compiler_params=pltpu.CompilerParams(
            dimension_semantics=("parallel",),
        ),
        cost_estimate=pl.CostEstimate(
            flops=flops, transcendentals=B_pad, bytes_accessed=bytes_accessed),
    )(x2d, cw, shift, w1_t, b1, w2_row, b2)

    return out[:B]


if __name__ == "__main__":
    # Small shapes consistent with the module: residual_channels=4, board 16x16
    # -> input_size = 16*16 = 256.
    B, C, H, W = 2, 4, 16, 16
    S = H * W

    key = jax.random.PRNGKey(0)
    k_x, k_cw, k_w1, k_b1, k_w2, k_b2 = jax.random.split(key, 6)

    x = jax.random.normal(k_x, (B, C, H, W), dtype=jnp.float32)

    # Conv2d(C, 1, 1x1, bias=False) weight, kaiming_normal_(fan_out) style:
    # fan_out = out_channels * kh * kw = 1, gain = sqrt(2) -> std = sqrt(2).
    conv_w = jax.random.normal(k_cw, (1, C, 1, 1), dtype=jnp.float32) * jnp.sqrt(2.0)

    # BatchNorm2d(1) default init (eval mode): gamma=1, beta=0, mean=0, var=1, eps=1e-5.
    gamma, beta, run_mean, run_var, eps = 1.0, 0.0, 0.0, 1.0, 1e-5
    bn_scale = gamma / jnp.sqrt(jnp.float32(run_var + eps))
    bn_shift = beta - run_mean * bn_scale

    # Linear layers, PyTorch-style U(-1/sqrt(fan_in), 1/sqrt(fan_in)).
    bnd1 = 1.0 / jnp.sqrt(jnp.float32(S))
    fc1_w = jax.random.uniform(k_w1, (256, S), jnp.float32, -bnd1, bnd1)
    fc1_b = jax.random.uniform(k_b1, (256,), jnp.float32, -bnd1, bnd1)
    bnd2 = 1.0 / jnp.sqrt(jnp.float32(256))
    fc2_w = jax.random.uniform(k_w2, (1, 256), jnp.float32, -bnd2, bnd2)
    fc2_b = jax.random.uniform(k_b2, (1,), jnp.float32, -bnd2, bnd2)

    out = value_head(x, conv_w, bn_scale, bn_shift, fc1_w, fc1_b, fc2_w, fc2_b)
    out = jax.block_until_ready(out)

    # Pure-JAX reference check of the same math.
    conv_ref = jnp.einsum("bchw,c->bhw", x, conv_w[0, :, 0, 0]).reshape(B, S)
    y_ref = jnp.maximum(conv_ref * bn_scale + bn_shift, 0.0)
    h_ref = jnp.maximum(y_ref @ fc1_w.T + fc1_b, 0.0)
    v_ref = jnp.tanh(h_ref @ fc2_w.T + fc2_b)
    assert out.shape == (B, 1)
    assert jnp.allclose(out, v_ref, atol=1e-5, rtol=1e-5)

    print("KERNEL_OK")
</pallas_src>

<mosaic_0001>
module attributes {stable_mosaic.version = 11 : i64} {
  func.func @value_head_kernel(%arg0: i32, %arg1: memref<8x1024xf32, #tpu.memory_space<vmem>>, %arg2: memref<4xf32, #tpu.memory_space<smem>>, %arg3: memref<1xf32, #tpu.memory_space<smem>>, %arg4: memref<256x256xf32, #tpu.memory_space<vmem>>, %arg5: memref<1x256xf32, #tpu.memory_space<vmem>>, %arg6: memref<1x256xf32, #tpu.memory_space<vmem>>, %arg7: memref<1xf32, #tpu.memory_space<smem>>, %arg8: memref<8x1xf32, #tpu.memory_space<vmem>>) attributes {dimension_semantics = [#tpu.dimension_semantics<parallel>], iteration_bounds = array<i64: 1>, scalar_prefetch = 0 : i64, scratch_operands = 0 : i64, tpu.core_type = #tpu.core_type<tc>, window_params = [{transform_indices = @transform_0, window_bounds = array<i64: 8, 1024>}, {transform_indices = @transform_1, window_bounds = array<i64: 4>}, {transform_indices = @transform_2, window_bounds = array<i64: 1>}, {pipeline_mode = #tpu.pipeline_mode<synchronous>, transform_indices = @transform_3, window_bounds = array<i64: 256, 256>}, {pipeline_mode = #tpu.pipeline_mode<synchronous>, transform_indices = @transform_4, window_bounds = array<i64: 1, 256>}, {pipeline_mode = #tpu.pipeline_mode<synchronous>, transform_indices = @transform_5, window_bounds = array<i64: 1, 256>}, {transform_indices = @transform_6, window_bounds = array<i64: 1>}, {transform_indices = @transform_7, window_bounds = array<i64: 8, 1>}]} {
    %c0 = arith.constant 0 : index
    %0 = memref.load %arg2[%c0] : memref<4xf32, #tpu.memory_space<smem>>
    %c0_0 = arith.constant 0 : index
    %c0_1 = arith.constant 0 : index
    %1 = vector.load %arg1[%c0_0, %c0_1] : memref<8x1024xf32, #tpu.memory_space<vmem>>, vector<8x256xf32>
    %2 = vector.broadcast %0 : f32 to vector<8x256xf32>
    %3 = arith.mulf %2, %1 : vector<8x256xf32>
    %c1 = arith.constant 1 : index
    %4 = memref.load %arg2[%c1] : memref<4xf32, #tpu.memory_space<smem>>
    %c0_2 = arith.constant 0 : index
    %c256 = arith.constant 256 : index
    %5 = vector.load %arg1[%c0_2, %c256] : memref<8x1024xf32, #tpu.memory_space<vmem>>, vector<8x256xf32>
    %6 = vector.broadcast %4 : f32 to vector<8x256xf32>
    %7 = arith.mulf %6, %5 : vector<8x256xf32>
    %8 = arith.addf %3, %7 : vector<8x256xf32>
    %c2 = arith.constant 2 : index
    %9 = memref.load %arg2[%c2] : memref<4xf32, #tpu.memory_space<smem>>
    %c0_3 = arith.constant 0 : index
    %c512 = arith.constant 512 : index
    %10 = vector.load %arg1[%c0_3, %c512] : memref<8x1024xf32, #tpu.memory_space<vmem>>, vector<8x256xf32>
    %11 = vector.broadcast %9 : f32 to vector<8x256xf32>
    %12 = arith.mulf %11, %10 : vector<8x256xf32>
    %13 = arith.addf %8, %12 : vector<8x256xf32>
    %c3 = arith.constant 3 : index
    %14 = memref.load %arg2[%c3] : memref<4xf32, #tpu.memory_space<smem>>
    %c0_4 = arith.constant 0 : index
    %c768 = arith.constant 768 : index
    %15 = vector.load %arg1[%c0_4, %c768] : memref<8x1024xf32, #tpu.memory_space<vmem>>, vector<8x256xf32>
    %16 = vector.broadcast %14 : f32 to vector<8x256xf32>
    %17 = arith.mulf %16, %15 : vector<8x256xf32>
    %18 = arith.addf %13, %17 : vector<8x256xf32>
    %c0_5 = arith.constant 0 : index
    %19 = memref.load %arg3[%c0_5] : memref<1xf32, #tpu.memory_space<smem>>
    %20 = vector.broadcast %19 : f32 to vector<8x256xf32>
    %21 = arith.addf %18, %20 : vector<8x256xf32>
    %cst = arith.constant 0.000000e+00 : f32
    %22 = vector.broadcast %cst : f32 to vector<8x256xf32>
    %23 = arith.maximumf %21, %22 : vector<8x256xf32>
    %c0_6 = arith.constant 0 : index
    %c0_7 = arith.constant 0 : index
    %24 = vector.load %arg4[%c0_6, %c0_7] : memref<256x256xf32, #tpu.memory_space<vmem>>, vector<256x256xf32>
    %cst_8 = arith.constant dense<0.000000e+00> : vector<8x256xf32>
    %25 = tpu.matmul %23, %24, %cst_8 {dimension_numbers = #tpu.dot_dimension_numbers<[1], [0], [0], [1], [0, 0, 1, 1], [], []>} : vector<8x256xf32>, vector<256x256xf32>, vector<8x256xf32> -> vector<8x256xf32>
    %c0_9 = arith.constant 0 : index
    %c0_10 = arith.constant 0 : index
    %26 = vector.load %arg5[%c0_9, %c0_10] : memref<1x256xf32, #tpu.memory_space<vmem>>, vector<1x256xf32>
    %27 = vector.broadcast %26 : vector<1x256xf32> to vector<8x256xf32>
    %28 = arith.addf %25, %27 : vector<8x256xf32>
    %cst_11 = arith.constant 0.000000e+00 : f32
    %29 = vector.broadcast %cst_11 : f32 to vector<8x256xf32>
    %30 = arith.maximumf %28, %29 : vector<8x256xf32>
    %c0_12 = arith.constant 0 : index
    %c0_13 = arith.constant 0 : index
    %31 = vector.load %arg6[%c0_12, %c0_13] : memref<1x256xf32, #tpu.memory_space<vmem>>, vector<1x256xf32>
    %32 = vector.broadcast %31 : vector<1x256xf32> to vector<8x256xf32>
    %33 = arith.mulf %30, %32 : vector<8x256xf32>
    %cst_14 = arith.constant dense<0.000000e+00> : vector<8xf32>
    %34 = vector.multi_reduction <add>, %33, %cst_14 [1] : vector<8x256xf32> to vector<8xf32>
    %35 = vector.shape_cast %34 : vector<8xf32> to vector<8x1xf32>
    %c0_15 = arith.constant 0 : index
    %36 = memref.load %arg7[%c0_15] : memref<1xf32, #tpu.memory_space<smem>>
    %37 = vector.broadcast %36 : f32 to vector<8x1xf32>
    %38 = arith.addf %35, %37 : vector<8x1xf32>
    %39 = math.tanh %38 : vector<8x1xf32>
    %c0_16 = arith.constant 0 : index
    %c0_17 = arith.constant 0 : index
    %40 = vector.load %arg8[%c0_16, %c0_17] : memref<8x1xf32, #tpu.memory_space<vmem>>, vector<8x1xf32>
    tpu.vector_store %arg8[%c0_16, %c0_17], %39 {strides = array<i32>} : memref<8x1xf32, #tpu.memory_space<vmem>>, vector<8x1xf32>,
    return
  }
  func.func @transform_0(%arg0: i32) -> (i32, i32) {
    %c0_i32 = arith.constant 0 : i32
    %c0_i32_0 = arith.constant 0 : i32
    return %arg0, %c0_i32 : i32, i32
  }
  func.func @transform_1(%arg0: i32) -> i32 {
    %c0_i32 = arith.constant 0 : i32
    %c0_i32_0 = arith.constant 0 : i32
    return %c0_i32 : i32
  }
  func.func @transform_2(%arg0: i32) -> i32 {
    %c0_i32 = arith.constant 0 : i32
    %c0_i32_0 = arith.constant 0 : i32
    return %c0_i32 : i32
  }
  func.func @transform_3(%arg0: i32) -> (i32, i32) {
    %c0_i32 = arith.constant 0 : i32
    %c0_i32_0 = arith.constant 0 : i32
    %c0_i32_1 = arith.constant 0 : i32
    return %c0_i32, %c0_i32_0 : i32, i32
  }
  func.func @transform_4(%arg0: i32) -> (i32, i32) {
    %c0_i32 = arith.constant 0 : i32
    %c0_i32_0 = arith.constant 0 : i32
    %c0_i32_1 = arith.constant 0 : i32
    return %c0_i32, %c0_i32_0 : i32, i32
  }
  func.func @transform_5(%arg0: i32) -> (i32, i32) {
    %c0_i32 = arith.constant 0 : i32
    %c0_i32_0 = arith.constant 0 : i32
    %c0_i32_1 = arith.constant 0 : i32
    return %c0_i32, %c0_i32_0 : i32, i32
  }
  func.func @transform_6(%arg0: i32) -> i32 {
    %c0_i32 = arith.constant 0 : i32
    %c0_i32_0 = arith.constant 0 : i32
    return %c0_i32 : i32
  }
  func.func @transform_7(%arg0: i32) -> (i32, i32) {
    %c0_i32 = arith.constant 0 : i32
    %c0_i32_0 = arith.constant 0 : i32
    return %arg0, %c0_i32 : i32, i32
  }
}

</mosaic_0001>

<llo_original>
// kernel: tpu_custom_call.1
$region0: #{tpu_custom_call.1}
  #allocation0 [shape = 'u32[]', space=smem, size = 0x4, offset = 0x4, fixed_abs, tag = 'smem constant byte address 0x4 - core index']
  #allocation1 [shape = 'u32[72,128]{1,0:T(1,128)}', space=vmem, size = 0x9000, scoped, tag = 'internal scratch']
  #allocation2 [shape = 'f32[1]{0:T(128)S(6)}', space=smem, size = 0x200, scoped, tag = 'scoped memory for tpu_custom_call.1']
  #allocation3 [shape = 'f32[1]{0:T(128)S(6)}', space=smem, size = 0x200, scoped, tag = 'scoped memory for tpu_custom_call.1']
  %s0 = inlined_call_operand.hbm [shape: f32[8,1024], index: 0, kind: input, shape index: {}]
  %s1 = inlined_call_operand.hbm [shape: f32[4], index: 1, kind: input, shape index: {}]
  %s2 = inlined_call_operand.<no memory space> [shape: f32[1], index: 2, kind: input, shape index: {}]
  %s3 = inlined_call_operand.hbm [shape: f32[256,256], index: 3, kind: input, shape index: {}]
  %s4 = inlined_call_operand.vmem [shape: f32[1,256], index: 4, kind: input, shape index: {}]
  %s5 = inlined_call_operand.vmem [shape: f32[1,256], index: 5, kind: input, shape index: {}]
  %s6 = inlined_call_operand.<no memory space> [shape: f32[1], index: 6, kind: input, shape index: {}]
  %s7 = inlined_call_operand.vmem [shape: f32[8,1], index: 7, kind: output, shape index: {}]
  %s8 = sld [smem:[#allocation0]]
  $region50: #{tpu_custom_call.1} parent=0
    _
  %s10 = ssub.s32 1, %s8
  %s11 = scalar_select 0, %s10, %s8
  %12 = sst [smem:[#allocation2]] %s2
  %13 = sst [smem:[#allocation3]] %s6
  $region1: #{tpu_custom_call.1} parent=0
    #allocation4 [shape = 'u8[32768]{0}', space=vmem, size = 0x8000, scoped, tag = 'input window, operand 0, single buffered']
    #allocation5 [shape = 's32[1]{0}', space=sflag, size = 0x4, scoped, tag = 'scoped memory for tpu_custom_call.1']
    #allocation6 [shape = 's32[1]{0}', space=sflag, size = 0x4, scoped, tag = 'scoped memory for tpu_custom_call.1']
    #allocation7 [shape = 'u8[512]{0}', space=smem, size = 0x200, scoped, tag = 'input window, operand 1, single buffered']
    #allocation8 [shape = 'u8[262144]{0}', space=vmem, size = 0x40000, scoped, tag = 'input window, operand 3, single buffered']
    #allocation9 [shape = 's32[1]{0}', space=sflag, size = 0x4, scoped, tag = 'scoped memory for tpu_custom_call.1']
    %14 = vsyncpa [#allocation5], 0
    %15 = vsyncpa [#allocation6], 0
    %16 = vsyncpa [#allocation9], 0
    // Predicated region
    $region2: #{tpu_custom_call.1} parent=1 // pred_check
      _
    $region3: #{tpu_custom_call.1} parent=1 // pred_check_branch
      %18 = sbr.rel (0) target = $region5
    $region4: #{tpu_custom_call.1} parent=1 // pred_region
      %20 = vsyncadd [#allocation5], 0
      %s22 = sshll.u32 %s0, 4
      %s23 = int_to_ptr.hbm [resolvable:$true] %s22
      %s24 = sshll.u32 [#allocation4], 4
      %s25 = int_to_ptr.vmem [resolvable:$true] %s24
      %27 = dma.hbm_to_vmem [thread:$0]  %s23, 1024, %s25, [#allocation5]
    $region5: #{tpu_custom_call.1} parent=1 // pred_fallthru
      _
    // Predicated region
    $region6: #{tpu_custom_call.1} parent=1 // pred_check
      _
    $region7: #{tpu_custom_call.1} parent=1 // pred_check_branch
      %29 = sbr.rel (0) target = $region9
    $region8: #{tpu_custom_call.1} parent=1 // pred_region
      %31 = vsyncadd [#allocation6], 0
      %s33 = sshll.u32 %s1, 4
      %s34 = int_to_ptr.hbm [resolvable:$true] %s33
      %36 = dma.hbm_to_smem %s34, 16, [#allocation7], [#allocation6]
    $region9: #{tpu_custom_call.1} parent=1 // pred_fallthru
      _
    // Predicated region
    $region10: #{tpu_custom_call.1} parent=1 // pred_check
      _
    $region11: #{tpu_custom_call.1} parent=1 // pred_check_branch
      %38 = sbr.rel (0) target = $region13
    $region12: #{tpu_custom_call.1} parent=1 // pred_region
      _
    $region13: #{tpu_custom_call.1} parent=1 // pred_fallthru
      _
    // Predicated region
    $region14: #{tpu_custom_call.1} parent=1 // pred_check
      _
    $region15: #{tpu_custom_call.1} parent=1 // pred_check_branch
      %40 = sbr.rel (0) target = $region17
    $region16: #{tpu_custom_call.1} parent=1 // pred_region
      %42 = vsyncadd [#allocation9], 0
      %s43 = sshll.u32 %s3, 4
      %s44 = int_to_ptr.hbm [resolvable:$true] %s43
      %s45 = sshll.u32 [#allocation8], 4
      %s46 = int_to_ptr.vmem [resolvable:$true] %s45
      %51 = dma.hbm_to_vmem [thread:$0]  %s44, 8192, %s46, [#allocation9], 256, 256, 16
    $region17: #{tpu_custom_call.1} parent=1 // pred_fallthru
      _
    // Predicated region
    $region18: #{tpu_custom_call.1} parent=1 // pred_check
      _
    $region19: #{tpu_custom_call.1} parent=1 // pred_check_branch
      %53 = sbr.rel (0) target = $region21
    $region20: #{tpu_custom_call.1} parent=1 // pred_region
      _
    $region21: #{tpu_custom_call.1} parent=1 // pred_fallthru
      _
    // Predicated region
    $region22: #{tpu_custom_call.1} parent=1 // pred_check
      _
    $region23: #{tpu_custom_call.1} parent=1 // pred_check_branch
      %55 = sbr.rel (0) target = $region25
    $region24: #{tpu_custom_call.1} parent=1 // pred_region
      _
    $region25: #{tpu_custom_call.1} parent=1 // pred_fallthru
      _
    // Predicated region
    $region26: #{tpu_custom_call.1} parent=1 // pred_check
      _
    $region27: #{tpu_custom_call.1} parent=1 // pred_check_branch
      %57 = sbr.rel (0) target = $region29
    $region28: #{tpu_custom_call.1} parent=1 // pred_region
      _
    $region29: #{tpu_custom_call.1} parent=1 // pred_fallthru
      _
    // Predicated region
    $region30: #{tpu_custom_call.1} parent=1 // pred_check
      _
    $region31: #{tpu_custom_call.1} parent=1 // pred_check_branch
      %59 = sbr.rel (0) target = $region33
    $region32: #{tpu_custom_call.1} parent=1 // pred_region
      %61 = dma.done [#allocation5], 1024
    $region33: #{tpu_custom_call.1} parent=1 // pred_fallthru
      _
    // Predicated region
    $region34: #{tpu_custom_call.1} parent=1 // pred_check
      _
    $region35: #{tpu_custom_call.1} parent=1 // pred_check_branch
      %63 = sbr.rel (0) target = $region37
    $region36: #{tpu_custom_call.1} parent=1 // pred_region
      %65 = dma.done [#allocation6], 16
    $region37: #{tpu_custom_call.1} parent=1 // pred_fallthru
      _
    // Predicated region
    $region38: #{tpu_custom_call.1} parent=1 // pred_check
      _
    $region39: #{tpu_custom_call.1} parent=1 // pred_check_branch
      %67 = sbr.rel (0) target = $region41
    $region40: #{tpu_custom_call.1} parent=1 // pred_region
      %69 = dma.done [#allocation9], 8192
    $region41: #{tpu_custom_call.1} parent=1 // pred_fallthru
      _
    %70 = sfence
    %s71 = sld [smem:[#allocation7]]
    %v72 = vld [vmem:[#allocation4] sm:$0xff]
    %v73 = vld [vmem:[#allocation4 + $0x8] sm:$0xff]
    %v74 = vstv %s71
    %v75 = vmul.f32 %v74, %v72
    %v76 = vmul.f32 %v74, %v73
    %s77 = sld [smem:[#allocation7 + $0x1]]
    %v78 = vld [vmem:[#allocation4 + $0x10] sm:$0xff]
    %v79 = vld [vmem:[#allocation4 + $0x18] sm:$0xff]
    %v80 = vstv %s77
    %v81 = vmul.f32 %v80, %v78
    %v82 = vmul.f32 %v80, %v79
    %v83 = vadd.f32 %v75, %v81
    %v84 = vadd.f32 %v76, %v82
    %s85 = sld [smem:[#allocation7 + $0x2]]
    %v86 = vld [vmem:[#allocation4 + $0x20] sm:$0xff]
    %v87 = vld [vmem:[#allocation4 + $0x28] sm:$0xff]
    %v88 = vstv %s85
    %v89 = vmul.f32 %v88, %v86
    %v90 = vmul.f32 %v88, %v87
    %v91 = vadd.f32 %v83, %v89
    %v92 = vadd.f32 %v84, %v90
    %s93 = sld [smem:[#allocation7 + $0x3]]
    %v94 = vld [vmem:[#allocation4 + $0x30] sm:$0xff]
    %v95 = vld [vmem:[#allocation4 + $0x38] sm:$0xff]
    %v96 = vstv %s93
    %v97 = vmul.f32 %v96, %v94
    %v98 = vmul.f32 %v96, %v95
    %v99 = vadd.f32 %v91, %v97
    %v100 = vadd.f32 %v92, %v98
    %s101 = sld [smem:[#allocation2]]
    %v102 = vstv %s101
    %v103 = vadd.f32 %v99, %v102
    %v104 = vadd.f32 %v100, %v102
    %v105 = vmax.f32 %v103, 0.0
    %v106 = vmax.f32 %v104, 0.0
    %v107 = vld [vmem:[#allocation8] sm:$0xff]
    %v108 = vld [vmem:[#allocation8 + $0x8] sm:$0xff]
    %v109 = vld [vmem:[#allocation8 + $0x10] sm:$0xff]
    %v110 = vld [vmem:[#allocation8 + $0x18] sm:$0xff]
    %v111 = vld [vmem:[#allocation8 + $0x20] sm:$0xff]
    %v112 = vld [vmem:[#allocation8 + $0x28] sm:$0xff]
    %v113 = vld [vmem:[#allocation8 + $0x30] sm:$0xff]
    %v114 = vld [vmem:[#allocation8 + $0x38] sm:$0xff]
    %v115 = vld [vmem:[#allocation8 + $0x40] sm:$0xff]
    %v116 = vld [vmem:[#allocation8 + $0x48] sm:$0xff]
    %v117 = vld [vmem:[#allocation8 + $0x50] sm:$0xff]
    %v118 = vld [vmem:[#allocation8 + $0x58] sm:$0xff]
    %v119 = vld [vmem:[#allocation8 + $0x60] sm:$0xff]
    %v120 = vld [vmem:[#allocation8 + $0x68] sm:$0xff]
    %v121 = vld [vmem:[#allocation8 + $0x70] sm:$0xff]
    %v122 = vld [vmem:[#allocation8 + $0x78] sm:$0xff]
    %v123 = vld [vmem:[#allocation8 + $0x80] sm:$0xff]
    %v124 = vld [vmem:[#allocation8 + $0x88] sm:$0xff]
    %v125 = vld [vmem:[#allocation8 + $0x90] sm:$0xff]
    %v126 = vld [vmem:[#allocation8 + $0x98] sm:$0xff]
    %v127 = vld [vmem:[#allocation8 + $0xa0] sm:$0xff]
    %v128 = vld [vmem:[#allocation8 + $0xa8] sm:$0xff]
    %v129 = vld [vmem:[#allocation8 + $0xb0] sm:$0xff]
    %v130 = vld [vmem:[#allocation8 + $0xb8] sm:$0xff]
    %v131 = vld [vmem:[#allocation8 + $0xc0] sm:$0xff]
    %v132 = vld [vmem:[#allocation8 + $0xc8] sm:$0xff]
    %v133 = vld [vmem:[#allocation8 + $0xd0] sm:$0xff]
    %v134 = vld [vmem:[#allocation8 + $0xd8] sm:$0xff]
    %v135 = vld [vmem:[#allocation8 + $0xe0] sm:$0xff]
    %v136 = vld [vmem:[#allocation8 + $0xe8] sm:$0xff]
    %v137 = vld [vmem:[#allocation8 + $0xf0] sm:$0xff]
    %v138 = vld [vmem:[#allocation8 + $0xf8] sm:$0xff]
    %v139 = vld [vmem:[#allocation8 + $0x100] sm:$0xff]
    %v140 = vld [vmem:[#allocation8 + $0x108] sm:$0xff]
    %v141 = vld [vmem:[#allocation8 + $0x110] sm:$0xff]
    %v142 = vld [vmem:[#allocation8 + $0x118] sm:$0xff]
    %v143 = vld [vmem:[#allocation8 + $0x120] sm:$0xff]
    %v144 = vld [vmem:[#allocation8 + $0x128] sm:$0xff]
    %v145 = vld [vmem:[#allocation8 + $0x130] sm:$0xff]
    %v146 = vld [vmem:[#allocation8 + $0x138] sm:$0xff]
    %v147 = vld [vmem:[#allocation8 + $0x140] sm:$0xff]
    %v148 = vld [vmem:[#allocation8 + $0x148] sm:$0xff]
    %v149 = vld [vmem:[#allocation8 + $0x150] sm:$0xff]
    %v150 = vld [vmem:[#allocation8 + $0x158] sm:$0xff]
    %v151 = vld [vmem:[#allocation8 + $0x160] sm:$0xff]
    %v152 = vld [vmem:[#allocation8 + $0x168] sm:$0xff]
    %v153 = vld [vmem:[#allocation8 + $0x170] sm:$0xff]
    %v154 = vld [vmem:[#allocation8 + $0x178] sm:$0xff]
    %v155 = vld [vmem:[#allocation8 + $0x180] sm:$0xff]
    %v156 = vld [vmem:[#allocation8 + $0x188] sm:$0xff]
    %v157 = vld [vmem:[#allocation8 + $0x190] sm:$0xff]
    %v158 = vld [vmem:[#allocation8 + $0x198] sm:$0xff]
    %v159 = vld [vmem:[#allocation8 + $0x1a0] sm:$0xff]
    %v160 = vld [vmem:[#allocation8 + $0x1a8] sm:$0xff]
    %v161 = vld [vmem:[#allocation8 + $0x1b0] sm:$0xff]
    %v162 = vld [vmem:[#allocation8 + $0x1b8] sm:$0xff]
    %v163 = vld [vmem:[#allocation8 + $0x1c0] sm:$0xff]
    %v164 = vld [vmem:[#allocation8 + $0x1c8] sm:$0xff]
    %v165 = vld [vmem:[#allocation8 + $0x1d0] sm:$0xff]
    %v166 = vld [vmem:[#allocation8 + $0x1d8] sm:$0xff]
    %v167 = vld [vmem:[#allocation8 + $0x1e0] sm:$0xff]
    %v168 = vld [vmem:[#allocation8 + $0x1e8] sm:$0xff]
    %v169 = vld [vmem:[#allocation8 + $0x1f0] sm:$0xff]
    %v170 = vld [vmem:[#allocation8 + $0x1f8] sm:$0xff]
    %v171 = vld [vmem:[%s4] sm:$0x3]
    %v173 = vperm.slane %v171, 0
    %v174 = vperm.slane %v171, 1
    %177 = vmatpush.msra.mxu0 %v137
    %178 = vmatpush.msra.mxu0 %v135
    %179 = vmatpush.msra.mxu0 %v133
    %180 = vmatpush.msra.mxu0 %v131
    %181 = vmatpush.msra.mxu0 %v129
    %182 = vmatpush.msra.mxu0 %v127
    %183 = vmatpush.msra.mxu0 %v125
    %184 = vmatpush.msra.mxu0 %v123
    %185 = vmatpush.msra.mxu0 %v121
    %186 = vmatpush.msra.mxu0 %v119
    %187 = vmatpush.msra.mxu0 %v117
    %188 = vmatpush.msra.mxu0 %v115
    %189 = vmatpush.msra.mxu0 %v113
    %190 = vmatpush.msra.mxu0 %v111
    %191 = vmatpush.msra.mxu0 %v109
    %192 = vmatpush.msra.mxu0 %v107
    %193 = vmatmul.f32.gmra.mxu0 %v105
    %v194 = vpop.f32.mrf.mxu0
    %v195 = vadd.f32 %v173, %v194
    %196 = vdwg.mxu0
    %197 = vmatpush.msra.mxu0 %v169
    %198 = vmatpush.msra.mxu0 %v167
    %199 = vmatpush.msra.mxu0 %v165
    %200 = vmatpush.msra.mxu0 %v163
    %201 = vmatpush.msra.mxu0 %v161
    %202 = vmatpush.msra.mxu0 %v159
    %203 = vmatpush.msra.mxu0 %v157
    %204 = vmatpush.msra.mxu0 %v155
    %205 = vmatpush.msra.mxu0 %v153
    %206 = vmatpush.msra.mxu0 %v151
    %207 = vmatpush.msra.mxu0 %v149
    %208 = vmatpush.msra.mxu0 %v147
    %209 = vmatpush.msra.mxu0 %v145
    %210 = vmatpush.msra.mxu0 %v143
    %211 = vmatpush.msra.mxu0 %v141
    %212 = vmatpush.msra.mxu0 %v139
    %213 = vmatmul.f32.gmra.mxu0 %v106
    %v214 = vpop.f32.mrf.mxu0
    %v215 = vadd.f32 %v195, %v214
    %216 = vdwg.mxu0
    %217 = vmatpush.msra.mxu0 %v138
    %218 = vmatpush.msra.mxu0 %v136
    %219 = vmatpush.msra.mxu0 %v134
    %220 = vmatpush.msra.mxu0 %v132
    %221 = vmatpush.msra.mxu0 %v130
    %222 = vmatpush.msra.mxu0 %v128
    %223 = vmatpush.msra.mxu0 %v126
    %224 = vmatpush.msra.mxu0 %v124
    %225 = vmatpush.msra.mxu0 %v122
    %226 = vmatpush.msra.mxu0 %v120
    %227 = vmatpush.msra.mxu0 %v118
    %228 = vmatpush.msra.mxu0 %v116
    %229 = vmatpush.msra.mxu0 %v114
    %230 = vmatpush.msra.mxu0 %v112
    %231 = vmatpush.msra.mxu0 %v110
    %232 = vmatpush.msra.mxu0 %v108
    %233 = vmatmul.f32.gmra.mxu0 %v105
    %v234 = vpop.f32.mrf.mxu0
    %v235 = vadd.f32 %v174, %v234
    %236 = vdwg.mxu0
    %237 = vmatpush.msra.mxu0 %v170
    %238 = vmatpush.msra.mxu0 %v168
    %239 = vmatpush.msra.mxu0 %v166
    %240 = vmatpush.msra.mxu0 %v164
    %241 = vmatpush.msra.mxu0 %v162
    %242 = vmatpush.msra.mxu0 %v160
    %243 = vmatpush.msra.mxu0 %v158
    %244 = vmatpush.msra.mxu0 %v156
    %245 = vmatpush.msra.mxu0 %v154
    %246 = vmatpush.msra.mxu0 %v152
    %247 = vmatpush.msra.mxu0 %v150
    %248 = vmatpush.msra.mxu0 %v148
    %249 = vmatpush.msra.mxu0 %v146
    %250 = vmatpush.msra.mxu0 %v144
    %251 = vmatpush.msra.mxu0 %v142
    %252 = vmatpush.msra.mxu0 %v140
    %253 = vmatmul.f32.gmra.mxu0 %v106
    %v254 = vpop.f32.mrf.mxu0
    %v255 = vadd.f32 %v235, %v254
    %256 = vdwg.mxu0
    %v257 = vmax.f32 %v215, 0.0
    %v258 = vmax.f32 %v255, 0.0
    %v259 = vld [vmem:[%s5] sm:$0x3]
    %v261 = vperm.slane %v259, 0
    %v262 = vperm.slane %v259, 1
    %v265 = vmul.f32 %v257, %v261
    %v266 = vmul.f32 %v258, %v262
    %v267 = vadd.f32 %v265, %v266
    %268 = vadd.xlane.f32.xlu0 %v267
    %v269 = vpop.xlane.xlu0 %268
    %s270 = sld [smem:[#allocation3]]
    %v271 = vstv %s270
    %v272 = vadd.f32 %v269, %v271
    %v273 = vtanh.pop %v272
    %vm274 = vcmask 7168
    %275 = vst.msk [vmem:[%s7] sm:$0xff] %vm274, %v273
    // Predicated region
    $region42: #{tpu_custom_call.1} parent=1 // pred_check
      _
    $region43: #{tpu_custom_call.1} parent=1 // pred_check_branch
      %277 = sbr.rel (0) target = $region45
    $region44: #{tpu_custom_call.1} parent=1 // pred_region
      _
    $region45: #{tpu_custom_call.1} parent=1 // pred_fallthru
      _
    // Predicated region
    $region46: #{tpu_custom_call.1} parent=1 // pred_check
      _
    $region47: #{tpu_custom_call.1} parent=1 // pred_check_branch
      %279 = sbr.rel (0) target = $region49
    $region48: #{tpu_custom_call.1} parent=1 // pred_region
      _
    $region49: #{tpu_custom_call.1} parent=1 // pred_fallthru
      _
    %280 = vsyncpa [#allocation5], 1
    %281 = vsyncpa [#allocation9], 1
    %282 = vsyncpa [#allocation6], 1

</llo_original>
